<compile_context>
chip_gen: v5e
topology: v5e:2x2
jax: 0.10.0
libtpu: 0.0.40
codegen_flags: <defaults>
</compile_context>

<pallas_src>
import functools

import jax
import jax.numpy as jnp
from jax.experimental import pallas as pl
from jax.experimental.pallas import tpu as pltpu


def _round_up(x, m):
    return ((x + m - 1) // m) * m


# ---------------------------------------------------------------------------
# Fast sine: single-step pi reduction + odd polynomial (all VPU, ~1.5x fewer
# VALU ops than the generic jnp.sin lowering).  Accurate to ~4e-6 absolute for
# |x| up to ~1e4, which covers SIREN arguments (|omega * z| stays modest).
# ---------------------------------------------------------------------------
_INV_PI = 0.3183098861837907
_PI_HI = 3.140625                    # exact in float32 (9 significand bits)
_PI_LO = 9.676535897932587e-04       # pi - _PI_HI
_S3 = -0.16666666666666666
_S5 = 0.008333333333333333
_S7 = -1.984126984126984e-4
_S9 = 2.7557319223985893e-6


def _fast_sin(x):
    n = jnp.round(x * _INV_PI)                       # nearest multiple of pi
    r = (x - n * _PI_HI) - n * _PI_LO                # |r| <= pi/2
    r2 = r * r
    p = r * (1.0 + r2 * (_S3 + r2 * (_S5 + r2 * (_S7 + r2 * _S9))))
    odd = (n.astype(jnp.int32) & 1) == 1             # sin(x) = (-1)^n sin(r)
    return jnp.where(odd, -p, p)


# ---------------------------------------------------------------------------
# Kernel: one MXU matmul + VPU bias add + VPU sine, lane-dense over O*F.
# ---------------------------------------------------------------------------
def siren_kernel(x_ref, w_ref, b_ref, o_ref, *, fast_sin):
    z = jnp.dot(x_ref[...], w_ref[...], preferred_element_type=jnp.float32)
    z = z + b_ref[...]                               # (tb, OFp) + (1, OFp)
    s = _fast_sin(z) if fast_sin else jnp.sin(z)
    o_ref[...] = s.astype(o_ref.dtype)


# ---------------------------------------------------------------------------
# Parameter expansion — hoisted out of the per-call hot path.  Recompute only
# when W / b / omega change (once per optimizer step; once ever for inference).
# ---------------------------------------------------------------------------
def expand_params(w_t, b, omega):
    """w_t: [In, O], b: [O]/[1,O], omega: [F]/[1,F] (any leading 1s).

    Returns (w_exp [In, OFp], b_exp [1, OFp], OF) with OFp = round_up(O*F, 128)
    zero-padded columns; column o*F + f matches torch's .view(B, -1) order.
    """
    In, O = w_t.shape
    omega = jnp.reshape(omega, (-1,)).astype(jnp.float32)
    b = jnp.reshape(b, (-1,)).astype(jnp.float32)
    F = omega.shape[0]
    OF = O * F
    OFp = _round_up(OF, 128)          # lane-dense output -> unmasked vst
    w_exp = (w_t.astype(jnp.float32)[:, :, None] * omega[None, None, :]).reshape(In, OF)
    b_exp = (b[:, None] * omega[None, :]).reshape(1, OF)
    if OFp != OF:
        w_exp = jnp.pad(w_exp, ((0, 0), (0, OFp - OF)))
        b_exp = jnp.pad(b_exp, ((0, 0), (0, OFp - OF)))
    return w_exp, b_exp, OF


# ---------------------------------------------------------------------------
# Forward wrapper.
# ---------------------------------------------------------------------------
def learnable_freq_siren_forward(x, w_exp, b_exp, out_cols=None, *,
                                 fast_sin=True, out_dtype=jnp.float32,
                                 vmem_budget_bytes=None):
    """x: [B, In] f32; (w_exp, b_exp, out_cols) from expand_params.

    Returns [B, out_cols] in out_dtype (f32 by default; bf16 is a good choice
    on v5e where the f32 output stream is co-binding with the sine work).
    """
    B, In = x.shape
    OFp = w_exp.shape[1]
    OF = OFp if out_cols is None else out_cols

    # ---- per-generation VMEM budget (v7x: 64 MiB, v5e/v6e: 128 MiB) ----
    if vmem_budget_bytes is None:
        try:
            cap = int(getattr(pltpu.get_tpu_info(), "vmem_capacity_bytes"))
        except Exception:
            cap = 64 * 1024 * 1024                   # v7x-safe fallback
        vmem_budget_bytes = (cap * 7) // 10
        vmem_limit = (cap * 85) // 100
    else:
        vmem_limit = int(vmem_budget_bytes)

    # ---- derive the batch tile from the VMEM budget ----
    in_v = _round_up(In, 128)                        # lane-padded x-tile footprint
    resident = 2 * (In * OFp + OFp) * 4              # weight+bias (conservative: 2 bufs)
    per_row = 2 * (in_v + OFp) * 4                   # double-buffered x tile + out tile
    # TODO(synk): if the expanded weight alone exceeds VMEM, tile over OFp too.
    tb = (vmem_budget_bytes - resident) // per_row
    tb = max(8, min(2048, (tb // 8) * 8))
    if B >= 16:
        # Keep >=2 (>=4 for large B) grid steps so dimension_semantics
        # ("parallel",) actually shards the batch across v7x's two TensorCores.
        steps = 4 if B >= 512 else 2
        tb = min(tb, max(8, _round_up(pl.cdiv(B, steps), 8)))
    tb = min(tb, _round_up(B, 8))

    grid = (pl.cdiv(B, tb),)                         # ragged tail: masked, no pad/slice

    def build(single_buffer_consts):
        const_kwargs = {}
        if single_buffer_consts and hasattr(pl, "Buffered"):
            # Constant index_map: fetched once, never revisited -> 1 buffer.
            const_kwargs = dict(pipeline_mode=pl.Buffered(1))
        in_specs = [
            pl.BlockSpec((tb, In), lambda i: (i, 0)),                     # streamed
            pl.BlockSpec((In, OFp), lambda i: (0, 0), **const_kwargs),    # resident W_exp
            pl.BlockSpec((1, OFp), lambda i: (0, 0), **const_kwargs),     # resident b_exp
        ]
        return pl.pallas_call(
            functools.partial(siren_kernel, fast_sin=fast_sin),
            out_shape=jax.ShapeDtypeStruct((B, OFp), out_dtype),
            grid=grid,
            in_specs=in_specs,
            out_specs=pl.BlockSpec((tb, OFp), lambda i: (i, 0)),
            compiler_params=pltpu.CompilerParams(
                dimension_semantics=("parallel",),
                vmem_limit_bytes=int(vmem_limit),
            ),
            cost_estimate=pl.CostEstimate(
                flops=2 * B * In * OFp + 12 * B * OFp,
                transcendentals=0 if fast_sin else B * OFp,
                bytes_accessed=4 * (B * In + In * OFp + OFp)
                + B * OFp * jnp.dtype(out_dtype).itemsize,
            ),
        )

    try:
        out = build(True)(x, w_exp, b_exp)
    except Exception:
        # Compatibility fallback for JAX versions without pipeline_mode/Buffered.
        out = build(False)(x, w_exp, b_exp)

    if OF != OFp:
        out = out[:, :OF]                            # only when O*F not lane-aligned
    return out


# ---------------------------------------------------------------------------
# Parameter init matching the PyTorch module, and a pure-JAX reference.
# ---------------------------------------------------------------------------
def init_params(key, in_features, out_features, num_frequencies,
                is_first=False, omega_init_range=(1.0, 60.0)):
    kw, kb = jax.random.split(key)
    bound_w = (1.0 if is_first else 6.0) / in_features
    # weight stored pre-transposed: [in_features, out_features]
    w_t = jax.random.uniform(kw, (in_features, out_features), jnp.float32,
                             minval=-bound_w, maxval=bound_w)
    bound_b = 1.0 / (in_features ** 0.5)             # nn.Linear default bias init
    b = jax.random.uniform(kb, (1, out_features), jnp.float32,
                           minval=-bound_b, maxval=bound_b)
    low, high = omega_init_range
    omega = jnp.linspace(low, high, num_frequencies, dtype=jnp.float32).reshape(1, -1)
    return w_t, b, omega


def _reference(x, w_t, b, omega):
    z = jnp.dot(x, w_t, precision=jax.lax.Precision.HIGHEST) + b       # [B, O]
    out = jnp.sin(z[:, :, None] * omega[0][None, None, :])             # [B, O, F]
    return out.reshape(x.shape[0], -1)


if __name__ == "__main__":
    in_features, out_features, num_frequencies = 16, 32, 4

    key = jax.random.PRNGKey(0)
    kx1, kx2, kp = jax.random.split(key, 3)
    w_t, b, omega = init_params(kp, in_features, out_features, num_frequencies,
                                is_first=False)

    # Expansion hoisted out of the per-call hot path (do it once per weight update).
    w_exp, b_exp, OF = expand_params(w_t, b, omega)

    # Case 1: tiny batch (single grid step).
    B1 = 8
    x1 = jax.random.normal(kx1, (B1, in_features), jnp.float32)
    out1 = jax.block_until_ready(learnable_freq_siren_forward(x1, w_exp, b_exp, OF))
    ref1 = _reference(x1, w_t, b, omega)
    assert out1.shape == (B1, OF)
    assert jnp.allclose(out1, ref1, atol=2e-4, rtol=2e-4)

    # Case 2: batch not a multiple of the tile — exercises the multi-step grid
    # with a masked ragged tail block (no padding / slicing copies).
    B2 = 100
    x2 = jax.random.normal(kx2, (B2, in_features), jnp.float32)
    out2 = jax.block_until_ready(learnable_freq_siren_forward(x2, w_exp, b_exp, OF))
    ref2 = _reference(x2, w_t, b, omega)
    assert out2.shape == (B2, OF)
    assert jnp.allclose(out2, ref2, atol=2e-4, rtol=2e-4)

    print("KERNEL_OK")
</pallas_src>

<mosaic_0001>
module attributes {stable_mosaic.version = 11 : i64} {
  func.func @siren_kernel(%arg0: i32, %arg1: memref<8x16xf32, #tpu.memory_space<vmem>>, %arg2: memref<16x128xf32, #tpu.memory_space<vmem>>, %arg3: memref<1x128xf32, #tpu.memory_space<vmem>>, %arg4: memref<8x128xf32, #tpu.memory_space<vmem>>) attributes {dimension_semantics = [#tpu.dimension_semantics<parallel>], iteration_bounds = array<i64: 1>, scalar_prefetch = 0 : i64, scratch_operands = 0 : i64, tpu.core_type = #tpu.core_type<tc>, window_params = [{transform_indices = @transform_0, window_bounds = array<i64: 8, 16>}, {pipeline_mode = #tpu.pipeline_mode<synchronous>, transform_indices = @transform_1, window_bounds = array<i64: 16, 128>}, {pipeline_mode = #tpu.pipeline_mode<synchronous>, transform_indices = @transform_2, window_bounds = array<i64: 1, 128>}, {transform_indices = @transform_3, window_bounds = array<i64: 8, 128>}]} {
    %c0 = arith.constant 0 : index
    %c0_0 = arith.constant 0 : index
    %0 = vector.load %arg1[%c0, %c0_0] : memref<8x16xf32, #tpu.memory_space<vmem>>, vector<8x16xf32>
    %c0_1 = arith.constant 0 : index
    %c0_2 = arith.constant 0 : index
    %1 = vector.load %arg2[%c0_1, %c0_2] : memref<16x128xf32, #tpu.memory_space<vmem>>, vector<16x128xf32>
    %cst = arith.constant dense<0.000000e+00> : vector<8x128xf32>
    %2 = tpu.matmul %0, %1, %cst {dimension_numbers = #tpu.dot_dimension_numbers<[1], [0], [0], [1], [0, 0, 1, 1], [], []>} : vector<8x16xf32>, vector<16x128xf32>, vector<8x128xf32> -> vector<8x128xf32>
    %c0_3 = arith.constant 0 : index
    %c0_4 = arith.constant 0 : index
    %3 = vector.load %arg3[%c0_3, %c0_4] : memref<1x128xf32, #tpu.memory_space<vmem>>, vector<1x128xf32>
    %4 = vector.broadcast %3 : vector<1x128xf32> to vector<8x128xf32>
    %5 = arith.addf %2, %4 : vector<8x128xf32>
    %cst_5 = arith.constant 0.318309873 : f32
    %6 = vector.broadcast %cst_5 : f32 to vector<8x128xf32>
    %7 = arith.mulf %5, %6 : vector<8x128xf32>
    %8 = math.roundeven %7 : vector<8x128xf32>
    %cst_6 = arith.constant 3.140625 : f32
    %9 = vector.broadcast %cst_6 : f32 to vector<8x128xf32>
    %10 = arith.mulf %8, %9 : vector<8x128xf32>
    %11 = arith.subf %5, %10 : vector<8x128xf32>
    %cst_7 = arith.constant 9.67653584E-4 : f32
    %12 = vector.broadcast %cst_7 : f32 to vector<8x128xf32>
    %13 = arith.mulf %8, %12 : vector<8x128xf32>
    %14 = arith.subf %11, %13 : vector<8x128xf32>
    %15 = arith.mulf %14, %14 : vector<8x128xf32>
    %cst_8 = arith.constant 2.75573188E-6 : f32
    %16 = vector.broadcast %cst_8 : f32 to vector<8x128xf32>
    %17 = arith.mulf %15, %16 : vector<8x128xf32>
    %cst_9 = arith.constant -1.98412701E-4 : f32
    %18 = vector.broadcast %cst_9 : f32 to vector<8x128xf32>
    %19 = arith.addf %18, %17 : vector<8x128xf32>
    %20 = arith.mulf %15, %19 : vector<8x128xf32>
    %cst_10 = arith.constant 0.00833333377 : f32
    %21 = vector.broadcast %cst_10 : f32 to vector<8x128xf32>
    %22 = arith.addf %21, %20 : vector<8x128xf32>
    %23 = arith.mulf %15, %22 : vector<8x128xf32>
    %cst_11 = arith.constant -0.166666672 : f32
    %24 = vector.broadcast %cst_11 : f32 to vector<8x128xf32>
    %25 = arith.addf %24, %23 : vector<8x128xf32>
    %26 = arith.mulf %15, %25 : vector<8x128xf32>
    %cst_12 = arith.constant 1.000000e+00 : f32
    %27 = vector.broadcast %cst_12 : f32 to vector<8x128xf32>
    %28 = arith.addf %27, %26 : vector<8x128xf32>
    %29 = arith.mulf %14, %28 : vector<8x128xf32>
    %30 = arith.fptosi %8 : vector<8x128xf32> to vector<8x128xi32>
    %c1_i32 = arith.constant 1 : i32
    %31 = vector.broadcast %c1_i32 : i32 to vector<8x128xi32>
    %32 = arith.andi %30, %31 : vector<8x128xi32>
    %c1_i32_13 = arith.constant 1 : i32
    %33 = vector.broadcast %c1_i32_13 : i32 to vector<8x128xi32>
    %34 = arith.cmpi eq, %32, %33 : vector<8x128xi32>
    %cst_14 = arith.constant 0.000000e+00 : f32
    %35 = vector.broadcast %cst_14 : f32 to vector<8x128xf32>
    %36 = arith.subf %35, %29 : vector<8x128xf32>
    %37 = arith.select %34, %36, %29 : vector<8x128xi1>, vector<8x128xf32>
    %c0_15 = arith.constant 0 : index
    %c0_16 = arith.constant 0 : index
    %38 = vector.load %arg4[%c0_15, %c0_16] : memref<8x128xf32, #tpu.memory_space<vmem>>, vector<8x128xf32>
    tpu.vector_store %arg4[%c0_15, %c0_16], %37 {strides = array<i32>} : memref<8x128xf32, #tpu.memory_space<vmem>>, vector<8x128xf32>,
    return
  }
  func.func @transform_0(%arg0: i32) -> (i32, i32) {
    %c0_i32 = arith.constant 0 : i32
    %c0_i32_0 = arith.constant 0 : i32
    return %arg0, %c0_i32 : i32, i32
  }
  func.func @transform_1(%arg0: i32) -> (i32, i32) {
    %c0_i32 = arith.constant 0 : i32
    %c0_i32_0 = arith.constant 0 : i32
    %c0_i32_1 = arith.constant 0 : i32
    return %c0_i32, %c0_i32_0 : i32, i32
  }
  func.func @transform_2(%arg0: i32) -> (i32, i32) {
    %c0_i32 = arith.constant 0 : i32
    %c0_i32_0 = arith.constant 0 : i32
    %c0_i32_1 = arith.constant 0 : i32
    return %c0_i32, %c0_i32_0 : i32, i32
  }
  func.func @transform_3(%arg0: i32) -> (i32, i32) {
    %c0_i32 = arith.constant 0 : i32
    %c0_i32_0 = arith.constant 0 : i32
    return %arg0, %c0_i32 : i32, i32
  }
}

module attributes {stable_mosaic.version = 11 : i64} {
  func.func @siren_kernel(%arg0: i32, %arg1: memref<8x16xf32, #tpu.memory_space<vmem>>, %arg2: memref<16x128xf32, #tpu.memory_space<vmem>>, %arg3: memref<1x128xf32, #tpu.memory_space<vmem>>, %arg4: memref<8x128xf32, #tpu.memory_space<vmem>>) attributes {dimension_semantics = [#tpu.dimension_semantics<parallel>], iteration_bounds = array<i64: 1>, scalar_prefetch = 0 : i64, scratch_operands = 0 : i64, tpu.core_type = #tpu.core_type<tc>, window_params = [{transform_indices = @transform_0, window_bounds = array<i64: 8, 16>}, {pipeline_mode = #tpu.pipeline_mode<synchronous>, transform_indices = @transform_1, window_bounds = array<i64: 16, 128>}, {pipeline_mode = #tpu.pipeline_mode<synchronous>, transform_indices = @transform_2, window_bounds = array<i64: 1, 128>}, {transform_indices = @transform_3, window_bounds = array<i64: 8, 128>}]} {
    %c0 = arith.constant 0 : index
    %c0_0 = arith.constant 0 : index
    %0 = vector.load %arg1[%c0, %c0_0] : memref<8x16xf32, #tpu.memory_space<vmem>>, vector<8x16xf32>
    %c0_1 = arith.constant 0 : index
    %c0_2 = arith.constant 0 : index
    %1 = vector.load %arg2[%c0_1, %c0_2] : memref<16x128xf32, #tpu.memory_space<vmem>>, vector<16x128xf32>
    %cst = arith.constant dense<0.000000e+00> : vector<8x128xf32>
    %2 = tpu.matmul %0, %1, %cst {dimension_numbers = #tpu.dot_dimension_numbers<[1], [0], [0], [1], [0, 0, 1, 1], [], []>} : vector<8x16xf32>, vector<16x128xf32>, vector<8x128xf32> -> vector<8x128xf32>
    %c0_3 = arith.constant 0 : index
    %c0_4 = arith.constant 0 : index
    %3 = vector.load %arg3[%c0_3, %c0_4] : memref<1x128xf32, #tpu.memory_space<vmem>>, vector<1x128xf32>
    %4 = vector.broadcast %3 : vector<1x128xf32> to vector<8x128xf32>
    %5 = arith.addf %2, %4 : vector<8x128xf32>
    %cst_5 = arith.constant 0.318309873 : f32
    %6 = vector.broadcast %cst_5 : f32 to vector<8x128xf32>
    %7 = arith.mulf %5, %6 : vector<8x128xf32>
    %8 = math.roundeven %7 : vector<8x128xf32>
    %cst_6 = arith.constant 3.140625 : f32
    %9 = vector.broadcast %cst_6 : f32 to vector<8x128xf32>
    %10 = arith.mulf %8, %9 : vector<8x128xf32>
    %11 = arith.subf %5, %10 : vector<8x128xf32>
    %cst_7 = arith.constant 9.67653584E-4 : f32
    %12 = vector.broadcast %cst_7 : f32 to vector<8x128xf32>
    %13 = arith.mulf %8, %12 : vector<8x128xf32>
    %14 = arith.subf %11, %13 : vector<8x128xf32>
    %15 = arith.mulf %14, %14 : vector<8x128xf32>
    %cst_8 = arith.constant 2.75573188E-6 : f32
    %16 = vector.broadcast %cst_8 : f32 to vector<8x128xf32>
    %17 = arith.mulf %15, %16 : vector<8x128xf32>
    %cst_9 = arith.constant -1.98412701E-4 : f32
    %18 = vector.broadcast %cst_9 : f32 to vector<8x128xf32>
    %19 = arith.addf %18, %17 : vector<8x128xf32>
    %20 = arith.mulf %15, %19 : vector<8x128xf32>
    %cst_10 = arith.constant 0.00833333377 : f32
    %21 = vector.broadcast %cst_10 : f32 to vector<8x128xf32>
    %22 = arith.addf %21, %20 : vector<8x128xf32>
    %23 = arith.mulf %15, %22 : vector<8x128xf32>
    %cst_11 = arith.constant -0.166666672 : f32
    %24 = vector.broadcast %cst_11 : f32 to vector<8x128xf32>
    %25 = arith.addf %24, %23 : vector<8x128xf32>
    %26 = arith.mulf %15, %25 : vector<8x128xf32>
    %cst_12 = arith.constant 1.000000e+00 : f32
    %27 = vector.broadcast %cst_12 : f32 to vector<8x128xf32>
    %28 = arith.addf %27, %26 : vector<8x128xf32>
    %29 = arith.mulf %14, %28 : vector<8x128xf32>
    %30 = arith.fptosi %8 : vector<8x128xf32> to vector<8x128xi32>
    %c1_i32 = arith.constant 1 : i32
    %31 = vector.broadcast %c1_i32 : i32 to vector<8x128xi32>
    %32 = arith.andi %30, %31 : vector<8x128xi32>
    %c1_i32_13 = arith.constant 1 : i32
    %33 = vector.broadcast %c1_i32_13 : i32 to vector<8x128xi32>
    %34 = arith.cmpi eq, %32, %33 : vector<8x128xi32>
    %cst_14 = arith.constant 0.000000e+00 : f32
    %35 = vector.broadcast %cst_14 : f32 to vector<8x128xf32>
    %36 = arith.subf %35, %29 : vector<8x128xf32>
    %37 = arith.select %34, %36, %29 : vector<8x128xi1>, vector<8x128xf32>
    %c0_15 = arith.constant 0 : index
    %c0_16 = arith.constant 0 : index
    %38 = vector.load %arg4[%c0_15, %c0_16] : memref<8x128xf32, #tpu.memory_space<vmem>>, vector<8x128xf32>
    tpu.vector_store %arg4[%c0_15, %c0_16], %37 {strides = array<i32>} : memref<8x128xf32, #tpu.memory_space<vmem>>, vector<8x128xf32>,
    return
  }
  func.func @transform_0(%arg0: i32) -> (i32, i32) {
    %c0_i32 = arith.constant 0 : i32
    %c0_i32_0 = arith.constant 0 : i32
    return %arg0, %c0_i32 : i32, i32
  }
  func.func @transform_1(%arg0: i32) -> (i32, i32) {
    %c0_i32 = arith.constant 0 : i32
    %c0_i32_0 = arith.constant 0 : i32
    %c0_i32_1 = arith.constant 0 : i32
    return %c0_i32, %c0_i32_0 : i32, i32
  }
  func.func @transform_2(%arg0: i32) -> (i32, i32) {
    %c0_i32 = arith.constant 0 : i32
    %c0_i32_0 = arith.constant 0 : i32
    %c0_i32_1 = arith.constant 0 : i32
    return %c0_i32, %c0_i32_0 : i32, i32
  }
  func.func @transform_3(%arg0: i32) -> (i32, i32) {
    %c0_i32 = arith.constant 0 : i32
    %c0_i32_0 = arith.constant 0 : i32
    return %arg0, %c0_i32 : i32, i32
  }
}

</mosaic_0001>

<llo_original>
// kernel: tpu_custom_call.1
$region0: #{tpu_custom_call.1}
  #allocation0 [shape = 'u32[]', space=smem, size = 0x4, offset = 0x4, fixed_abs, tag = 'smem constant byte address 0x4 - core index']
  #allocation1 [shape = 'u32[72,128]{1,0:T(1,128)}', space=vmem, size = 0x9000, scoped, tag = 'internal scratch']
  %s0 = inlined_call_operand.hbm [shape: f32[8,16], index: 0, kind: input, shape index: {}]
  %s1 = inlined_call_operand.hbm [shape: f32[16,128], index: 1, kind: input, shape index: {}]
  %s2 = inlined_call_operand.vmem [shape: f32[1,128], index: 2, kind: input, shape index: {}]
  %s3 = inlined_call_operand.hbm [shape: f32[8,128], index: 3, kind: output, shape index: {}]
  %s4 = sld [smem:[#allocation0]]
  $region30: #{tpu_custom_call.1} parent=0
    _
  %s6 = ssub.s32 1, %s4
  %s7 = scalar_select 0, %s6, %s4
  $region1: #{tpu_custom_call.1} parent=0
    #allocation2 [shape = 'u8[4096]{0}', space=vmem, size = 0x1000, scoped, tag = 'input window, operand 0, single buffered']
    #allocation3 [shape = 's32[1]{0}', space=sflag, size = 0x4, scoped, tag = 'scoped memory for tpu_custom_call.1']
    #allocation4 [shape = 's32[1]{0}', space=sflag, size = 0x4, scoped, tag = 'scoped memory for tpu_custom_call.1']
    #allocation5 [shape = 'u8[8192]{0}', space=vmem, size = 0x2000, scoped, tag = 'input window, operand 1, single buffered']
    #allocation6 [shape = 's32[1]{0}', space=sflag, size = 0x4, scoped, tag = 'scoped memory for tpu_custom_call.1']
    #allocation7 [shape = 'u8[4096]{0}', space=vmem, size = 0x1000, scoped, tag = 'output window, operand 0, single buffered']
    %8 = vsyncpa [#allocation3], 0
    %9 = vsyncpa [#allocation6], 0
    %10 = vsyncpa [#allocation4], 0
    // Predicated region
    $region2: #{tpu_custom_call.1} parent=1 // pred_check
      _
    $region3: #{tpu_custom_call.1} parent=1 // pred_check_branch
      %12 = sbr.rel (0) target = $region5
    $region4: #{tpu_custom_call.1} parent=1 // pred_region
      %14 = vsyncadd [#allocation3], 0
      %s16 = sshll.u32 %s0, 4
      %s17 = int_to_ptr.hbm [resolvable:$true] %s16
      %s18 = sshll.u32 [#allocation2], 4
      %s19 = int_to_ptr.vmem [resolvable:$true] %s18
      %21 = dma.hbm_to_vmem [thread:$0]  %s17, 128, %s19, [#allocation3]
    $region5: #{tpu_custom_call.1} parent=1 // pred_fallthru
      _
    // Predicated region
    $region6: #{tpu_custom_call.1} parent=1 // pred_check
      _
    $region7: #{tpu_custom_call.1} parent=1 // pred_check_branch
      %23 = sbr.rel (0) target = $region9
    $region8: #{tpu_custom_call.1} parent=1 // pred_region
      %25 = vsyncadd [#allocation6], 0
      %s26 = sshll.u32 %s1, 4
      %s27 = int_to_ptr.hbm [resolvable:$true] %s26
      %s28 = sshll.u32 [#allocation5], 4
      %s29 = int_to_ptr.vmem [resolvable:$true] %s28
      %34 = dma.hbm_to_vmem [thread:$0]  %s27, 256, %s29, [#allocation6], 128, 128, 8
    $region9: #{tpu_custom_call.1} parent=1 // pred_fallthru
      _
    // Predicated region
    $region10: #{tpu_custom_call.1} parent=1 // pred_check
      _
    $region11: #{tpu_custom_call.1} parent=1 // pred_check_branch
      %36 = sbr.rel (0) target = $region13
    $region12: #{tpu_custom_call.1} parent=1 // pred_region
      _
    $region13: #{tpu_custom_call.1} parent=1 // pred_fallthru
      _
    // Predicated region
    $region14: #{tpu_custom_call.1} parent=1 // pred_check
      _
    $region15: #{tpu_custom_call.1} parent=1 // pred_check_branch
      %38 = sbr.rel (0) target = $region17
    $region16: #{tpu_custom_call.1} parent=1 // pred_region
      %40 = dma.done [#allocation3], 128
    $region17: #{tpu_custom_call.1} parent=1 // pred_fallthru
      _
    // Predicated region
    $region18: #{tpu_custom_call.1} parent=1 // pred_check
      _
    $region19: #{tpu_custom_call.1} parent=1 // pred_check_branch
      %42 = sbr.rel (0) target = $region21
    $region20: #{tpu_custom_call.1} parent=1 // pred_region
      %44 = dma.done [#allocation6], 256
    $region21: #{tpu_custom_call.1} parent=1 // pred_fallthru
      _
    %v45 = vld [vmem:[#allocation2] sm:$0xff]
    %v46 = vld [vmem:[#allocation5] sm:$0xff]
    %v47 = vld [vmem:[#allocation5 + $0x8] sm:$0xff]
    %v48 = vld [vmem:[%s2] sm:$0x1]
    %v50 = vperm.slane %v48, 0
    %vm52 = vcmask 130048
    %v54 = vsel %vm52, %v45, 0
    %56 = vmatpush.msra.mxu0 0.0
    %57 = vmatpush.msra.mxu0 0.0
    %58 = vmatpush.msra.mxu0 0.0
    %59 = vmatpush.msra.mxu0 0.0
    %60 = vmatpush.msra.mxu0 0.0
    %61 = vmatpush.msra.mxu0 0.0
    %62 = vmatpush.msra.mxu0 0.0
    %63 = vmatpush.msra.mxu0 0.0
    %64 = vmatpush.msra.mxu0 0.0
    %65 = vmatpush.msra.mxu0 0.0
    %66 = vmatpush.msra.mxu0 0.0
    %67 = vmatpush.msra.mxu0 0.0
    %68 = vmatpush.msra.mxu0 0.0
    %69 = vmatpush.msra.mxu0 0.0
    %70 = vmatpush.msra.mxu0 %v47
    %71 = vmatpush.msra.mxu0 %v46
    %72 = vmatmul.f32.gmra.mxu0 %v54
    %v73 = vpop.f32.mrf.mxu0
    %v74 = vadd.f32 %v50, %v73
    %75 = vdwg.mxu0
    %v76 = vmul.f32 %v74, 0.31830987
    %v77 = vround.ne.pseudo %v76
    %v78 = vmul.f32 %v77, 3.140625
    %v79 = vsub.f32 %v74, %v78
    %v80 = vmul.f32 %v77, 0.0009676536
    %v81 = vsub.f32 %v79, %v80
    %v82 = vmul.f32 %v81, %v81
    %v83 = vmul.f32 %v82, 2.7557319e-06
    %v84 = vadd.f32 %v83, -0.0001984127
    %v85 = vmul.f32 %v82, %v84
    %v86 = vadd.f32 %v85, 0.008333334
    %v87 = vmul.f32 %v82, %v86
    %v88 = vadd.f32 %v87, -0.16666667
    %v89 = vmul.f32 %v82, %v88
    %v90 = vadd.f32 %v89, 1.0
    %v91 = vmul.f32 %v81, %v90
    %v92 = vcvt.f32.s32.ties.to.even %v76
    %v93 = vand.u32 %v92, 1
    %vm94 = vcmp.eq.s32.totalorder %v93, 1
    %v95 = vsub.f32 0.0, %v91
    %v96 = vsel %vm94, %v95, %v91
    %97 = vst [vmem:[#allocation7] sm:$0xff] %v96
    // Predicated region
    $region22: #{tpu_custom_call.1} parent=1 // pred_check
      _
    $region23: #{tpu_custom_call.1} parent=1 // pred_check_branch
      %99 = sbr.rel (0) target = $region25
    $region24: #{tpu_custom_call.1} parent=1 // pred_region
      %101 = vsyncadd [#allocation4], 0
      %s103 = sshll.u32 [#allocation7], 4
      %s104 = int_to_ptr.vmem [resolvable:$true] %s103
      %s105 = sshll.u32 %s3, 4
      %s106 = int_to_ptr.hbm [resolvable:$true] %s105
      %108 = dma.vmem_to_hbm [thread:$0]  %s104, 128, %s106, [#allocation4]
    $region25: #{tpu_custom_call.1} parent=1 // pred_fallthru
      _
    // Predicated region
    $region26: #{tpu_custom_call.1} parent=1 // pred_check
      _
    $region27: #{tpu_custom_call.1} parent=1 // pred_check_branch
      %110 = sbr.rel (0) target = $region29
    $region28: #{tpu_custom_call.1} parent=1 // pred_region
      %112 = dma.done [#allocation4], 128
    $region29: #{tpu_custom_call.1} parent=1 // pred_fallthru
      _
    %113 = vsyncpa [#allocation3], 1
    %114 = vsyncpa [#allocation6], 1
    %115 = vsyncpa [#allocation4], 1

// kernel: tpu_custom_call.1
$region0: #{tpu_custom_call.1}
  #allocation0 [shape = 'u32[]', space=smem, size = 0x4, offset = 0x4, fixed_abs, tag = 'smem constant byte address 0x4 - core index']
  #allocation1 [shape = 'u32[72,128]{1,0:T(1,128)}', space=vmem, size = 0x9000, scoped, tag = 'internal scratch']
  %s0 = inlined_call_operand.hbm [shape: f32[8,16], index: 0, kind: input, shape index: {}]
  %s1 = inlined_call_operand.hbm [shape: f32[16,128], index: 1, kind: input, shape index: {}]
  %s2 = inlined_call_operand.vmem [shape: f32[1,128], index: 2, kind: input, shape index: {}]
  %s3 = inlined_call_operand.hbm [shape: f32[8,128], index: 3, kind: output, shape index: {}]
  %s4 = sld [smem:[#allocation0]]
  $region30: #{tpu_custom_call.1} parent=0
    _
  %s6 = ssub.s32 1, %s4
  %s7 = scalar_select 0, %s6, %s4
  $region1: #{tpu_custom_call.1} parent=0
    #allocation2 [shape = 'u8[4096]{0}', space=vmem, size = 0x1000, scoped, tag = 'input window, operand 0, single buffered']
    #allocation3 [shape = 's32[1]{0}', space=sflag, size = 0x4, scoped, tag = 'scoped memory for tpu_custom_call.1']
    #allocation4 [shape = 's32[1]{0}', space=sflag, size = 0x4, scoped, tag = 'scoped memory for tpu_custom_call.1']
    #allocation5 [shape = 'u8[8192]{0}', space=vmem, size = 0x2000, scoped, tag = 'input window, operand 1, single buffered']
    #allocation6 [shape = 's32[1]{0}', space=sflag, size = 0x4, scoped, tag = 'scoped memory for tpu_custom_call.1']
    #allocation7 [shape = 'u8[4096]{0}', space=vmem, size = 0x1000, scoped, tag = 'output window, operand 0, single buffered']
    %8 = vsyncpa [#allocation3], 0
    %9 = vsyncpa [#allocation6], 0
    %10 = vsyncpa [#allocation4], 0
    // Predicated region
    $region2: #{tpu_custom_call.1} parent=1 // pred_check
      _
    $region3: #{tpu_custom_call.1} parent=1 // pred_check_branch
      %12 = sbr.rel (0) target = $region5
    $region4: #{tpu_custom_call.1} parent=1 // pred_region
      %14 = vsyncadd [#allocation3], 0
      %s16 = sshll.u32 %s0, 4
      %s17 = int_to_ptr.hbm [resolvable:$true] %s16
      %s18 = sshll.u32 [#allocation2], 4
      %s19 = int_to_ptr.vmem [resolvable:$true] %s18
      %21 = dma.hbm_to_vmem [thread:$0]  %s17, 128, %s19, [#allocation3]
    $region5: #{tpu_custom_call.1} parent=1 // pred_fallthru
      _
    // Predicated region
    $region6: #{tpu_custom_call.1} parent=1 // pred_check
      _
    $region7: #{tpu_custom_call.1} parent=1 // pred_check_branch
      %23 = sbr.rel (0) target = $region9
    $region8: #{tpu_custom_call.1} parent=1 // pred_region
      %25 = vsyncadd [#allocation6], 0
      %s26 = sshll.u32 %s1, 4
      %s27 = int_to_ptr.hbm [resolvable:$true] %s26
      %s28 = sshll.u32 [#allocation5], 4
      %s29 = int_to_ptr.vmem [resolvable:$true] %s28
      %34 = dma.hbm_to_vmem [thread:$0]  %s27, 256, %s29, [#allocation6], 128, 128, 8
    $region9: #{tpu_custom_call.1} parent=1 // pred_fallthru
      _
    // Predicated region
    $region10: #{tpu_custom_call.1} parent=1 // pred_check
      _
    $region11: #{tpu_custom_call.1} parent=1 // pred_check_branch
      %36 = sbr.rel (0) target = $region13
    $region12: #{tpu_custom_call.1} parent=1 // pred_region
      _
    $region13: #{tpu_custom_call.1} parent=1 // pred_fallthru
      _
    // Predicated region
    $region14: #{tpu_custom_call.1} parent=1 // pred_check
      _
    $region15: #{tpu_custom_call.1} parent=1 // pred_check_branch
      %38 = sbr.rel (0) target = $region17
    $region16: #{tpu_custom_call.1} parent=1 // pred_region
      %40 = dma.done [#allocation3], 128
    $region17: #{tpu_custom_call.1} parent=1 // pred_fallthru
      _
    // Predicated region
    $region18: #{tpu_custom_call.1} parent=1 // pred_check
      _
    $region19: #{tpu_custom_call.1} parent=1 // pred_check_branch
      %42 = sbr.rel (0) target = $region21
    $region20: #{tpu_custom_call.1} parent=1 // pred_region
      %44 = dma.done [#allocation6], 256
    $region21: #{tpu_custom_call.1} parent=1 // pred_fallthru
      _
    %v45 = vld [vmem:[#allocation2] sm:$0xff]
    %v46 = vld [vmem:[#allocation5] sm:$0xff]
    %v47 = vld [vmem:[#allocation5 + $0x8] sm:$0xff]
    %v48 = vld [vmem:[%s2] sm:$0x1]
    %v50 = vperm.slane %v48, 0
    %vm52 = vcmask 130048
    %v54 = vsel %vm52, %v45, 0
    %56 = vmatpush.msra.mxu0 0.0
    %57 = vmatpush.msra.mxu0 0.0
    %58 = vmatpush.msra.mxu0 0.0
    %59 = vmatpush.msra.mxu0 0.0
    %60 = vmatpush.msra.mxu0 0.0
    %61 = vmatpush.msra.mxu0 0.0
    %62 = vmatpush.msra.mxu0 0.0
    %63 = vmatpush.msra.mxu0 0.0
    %64 = vmatpush.msra.mxu0 0.0
    %65 = vmatpush.msra.mxu0 0.0
    %66 = vmatpush.msra.mxu0 0.0
    %67 = vmatpush.msra.mxu0 0.0
    %68 = vmatpush.msra.mxu0 0.0
    %69 = vmatpush.msra.mxu0 0.0
    %70 = vmatpush.msra.mxu0 %v47
    %71 = vmatpush.msra.mxu0 %v46
    %72 = vmatmul.f32.gmra.mxu0 %v54
    %v73 = vpop.f32.mrf.mxu0
    %v74 = vadd.f32 %v50, %v73
    %75 = vdwg.mxu0
    %v76 = vmul.f32 %v74, 0.31830987
    %v77 = vround.ne.pseudo %v76
    %v78 = vmul.f32 %v77, 3.140625
    %v79 = vsub.f32 %v74, %v78
    %v80 = vmul.f32 %v77, 0.0009676536
    %v81 = vsub.f32 %v79, %v80
    %v82 = vmul.f32 %v81, %v81
    %v83 = vmul.f32 %v82, 2.7557319e-06
    %v84 = vadd.f32 %v83, -0.0001984127
    %v85 = vmul.f32 %v82, %v84
    %v86 = vadd.f32 %v85, 0.008333334
    %v87 = vmul.f32 %v82, %v86
    %v88 = vadd.f32 %v87, -0.16666667
    %v89 = vmul.f32 %v82, %v88
    %v90 = vadd.f32 %v89, 1.0
    %v91 = vmul.f32 %v81, %v90
    %v92 = vcvt.f32.s32.ties.to.even %v76
    %v93 = vand.u32 %v92, 1
    %vm94 = vcmp.eq.s32.totalorder %v93, 1
    %v95 = vsub.f32 0.0, %v91
    %v96 = vsel %vm94, %v95, %v91
    %97 = vst [vmem:[#allocation7] sm:$0xff] %v96
    // Predicated region
    $region22: #{tpu_custom_call.1} parent=1 // pred_check
      _
    $region23: #{tpu_custom_call.1} parent=1 // pred_check_branch
      %99 = sbr.rel (0) target = $region25
    $region24: #{tpu_custom_call.1} parent=1 // pred_region
      %101 = vsyncadd [#allocation4], 0
      %s103 = sshll.u32 [#allocation7], 4
      %s104 = int_to_ptr.vmem [resolvable:$true] %s103
      %s105 = sshll.u32 %s3, 4
      %s106 = int_to_ptr.hbm [resolvable:$true] %s105
      %108 = dma.vmem_to_hbm [thread:$0]  %s104, 128, %s106, [#allocation4]
    $region25: #{tpu_custom_call.1} parent=1 // pred_fallthru
      _
    // Predicated region
    $region26: #{tpu_custom_call.1} parent=1 // pred_check
      _
    $region27: #{tpu_custom_call.1} parent=1 // pred_check_branch
      %110 = sbr.rel (0) target = $region29
    $region28: #{tpu_custom_call.1} parent=1 // pred_region
      %112 = dma.done [#allocation4], 128
    $region29: #{tpu_custom_call.1} parent=1 // pred_fallthru
      _
    %113 = vsyncpa [#allocation3], 1
    %114 = vsyncpa [#allocation6], 1
    %115 = vsyncpa [#allocation4], 1

</llo_original>
